<compile_context>
chip_gen: v5e
topology: v5e:2x2
jax: 0.10.0
libtpu: 0.0.40
codegen_flags: <defaults>
</compile_context>

<pallas_src>
import functools

import jax
import jax.numpy as jnp
from jax import lax
from jax.experimental import pallas as pl
from jax.experimental.pallas import tpu as pltpu

LANE = 128  # pad all feature/class dims to one full vreg lane width


def fused_graphsage_kernel(num_classes,
                           a_ref, x_ref,
                           w1s_ref, w1n_ref, w2s_ref, w2n_ref, w3s_ref, w3n_ref,
                           sc1_ref, sh1_ref, sc2_ref, sh2_ref, b3_ref,
                           out_ref):
    a = a_ref[...]            # [N, N]    bf16  (row-normalized adjacency, self-loops)
    h = x_ref[...]            # [N, LANE] bf16  (padded node features)

    def sage(h_bf16, ws_ref, wn_ref):
        # 'mean' aggregation == A_norm @ H ; then two accumulated K=128 dots
        # (no concat temp): H @ W_self + (A@H) @ W_neigh.
        neigh = jnp.dot(a, h_bf16, preferred_element_type=jnp.float32).astype(jnp.bfloat16)
        return (jnp.dot(h_bf16, ws_ref[...], preferred_element_type=jnp.float32)
                + jnp.dot(neigh, wn_ref[...], preferred_element_type=jnp.float32))

    # Layer 1: SAGE + (bias folded into) BN + ReLU   (f32 elementwise, bf16 for next MXU)
    z1 = sage(h, w1s_ref, w1n_ref)
    h1 = jnp.maximum(z1 * sc1_ref[...] + sh1_ref[...], 0.0).astype(jnp.bfloat16)

    # Layer 2: SAGE + BN + ReLU
    z2 = sage(h1, w2s_ref, w2n_ref)
    h2 = jnp.maximum(z2 * sc2_ref[...] + sh2_ref[...], 0.0).astype(jnp.bfloat16)

    # Layer 3: SAGE + bias + log_softmax over the real (unpadded) class lanes
    z3 = sage(h2, w3s_ref, w3n_ref) + b3_ref[...]
    col = lax.broadcasted_iota(jnp.int32, z3.shape, dimension=1)
    z3 = jnp.where(col < num_classes, z3, -1e30)   # safe: z3/output stay f32
    m = jnp.max(z3, axis=-1, keepdims=True)
    lse = m + jnp.log(jnp.sum(jnp.exp(z3 - m), axis=-1, keepdims=True))
    out_ref[...] = z3 - lse


# ----------------------------- host-side plumbing -----------------------------

def _pad_lanes(x, width=LANE):
    p = width - x.shape[-1]
    return jnp.pad(x, ((0, 0), (0, p))) if p > 0 else x


def _pad_weight(w):
    """Pad (fi, fo) -> (LANE, LANE) bf16."""
    fi, fo = w.shape
    return (jnp.zeros((LANE, LANE), jnp.float32).at[:fi, :fo].set(w)).astype(jnp.bfloat16)


def prepare_params(layers, bns):
    """Pad weights, fold SAGE bias into BN shift. Done once, outside the hot path."""
    (w1s, w1n, b1), (w2s, w2n, b2), (w3s, w3n, b3) = layers
    (sc1, sh1), (sc2, sh2) = bns
    W1s, W1n = _pad_weight(w1s), _pad_weight(w1n)
    W2s, W2n = _pad_weight(w2s), _pad_weight(w2n)
    W3s, W3n = _pad_weight(w3s), _pad_weight(w3n)
    # BN(eval): scale*(hW + b) + shift = scale*hW + (scale*b + shift)
    sc1p, sh1p = _pad_lanes(sc1), _pad_lanes(sc1 * b1 + sh1)      # (1, LANE) f32 each
    sc2p, sh2p = _pad_lanes(sc2), _pad_lanes(sc2 * b2 + sh2)
    b3p = _pad_lanes(b3)                                          # (1, LANE) f32
    num_classes = int(w3s.shape[1])
    return (W1s, W1n, W2s, W2n, W3s, W3n, sc1p, sh1p, sc2p, sh2p, b3p), num_classes


def prepare_inputs(a_norm, x):
    """Cast/pad graph inputs ONCE (per-graph), outside the per-call hot path."""
    a_bf = a_norm.astype(jnp.bfloat16)
    x_bf = _pad_lanes(x).astype(jnp.bfloat16)
    return a_bf, x_bf


@functools.partial(jax.jit, static_argnames=("num_classes",))
def graphsage_forward(a_bf, x_bf, prepped, num_classes):
    W1s, W1n, W2s, W2n, W3s, W3n, sc1, sh1, sc2, sh2, b3p = prepped
    n = x_bf.shape[0]

    flops = 3 * (2 * n * n * LANE + 2 * 2 * n * LANE * LANE)
    bytes_accessed = (a_bf.size * 2 + x_bf.size * 2
                      + (W1s.size + W1n.size + W2s.size + W2n.size + W3s.size + W3n.size) * 2
                      + (sc1.size + sh1.size + sc2.size + sh2.size + b3p.size) * 4
                      + n * LANE * 4)

    out = pl.pallas_call(
        functools.partial(fused_graphsage_kernel, num_classes),
        out_shape=jax.ShapeDtypeStruct((n, LANE), jnp.float32),
        in_specs=[pl.BlockSpec(memory_space=pltpu.MemorySpace.VMEM)] * 13,
        out_specs=pl.BlockSpec(memory_space=pltpu.MemorySpace.VMEM),
        cost_estimate=pl.CostEstimate(flops=flops,
                                      transcendentals=2 * n * LANE,
                                      bytes_accessed=bytes_accessed),
    )(a_bf, x_bf, W1s, W1n, W2s, W2n, W3s, W3n, sc1, sh1, sc2, sh2, b3p)
    return out[:, :num_classes]


def init_params(key, in_size, num_hidden, num_classes):
    """Deterministic init of SAGEConv (W_self, W_neigh, b) x3 and folded BN params x2."""
    dims = [(in_size, num_hidden), (num_hidden, num_hidden), (num_hidden, num_classes)]
    layers = []
    for fi, fo in dims:
        key, k1, k2, k3 = jax.random.split(key, 4)
        w_self = jax.random.normal(k1, (fi, fo), jnp.float32) / jnp.sqrt(float(fi))
        w_neigh = jax.random.normal(k2, (fi, fo), jnp.float32) / jnp.sqrt(float(fi))
        b = 0.01 * jax.random.normal(k3, (1, fo), jnp.float32)
        layers.append((w_self, w_neigh, b))
    bns = []
    eps = 1e-5
    for _ in range(2):
        key, k1, k2 = jax.random.split(key, 3)
        gamma = 1.0 + 0.1 * jax.random.normal(k1, (1, num_hidden), jnp.float32)
        beta = 0.1 * jax.random.normal(k2, (1, num_hidden), jnp.float32)
        running_mean = jnp.zeros((1, num_hidden), jnp.float32)
        running_var = jnp.ones((1, num_hidden), jnp.float32)
        scale = gamma / jnp.sqrt(running_var + eps)
        shift = beta - running_mean * scale
        bns.append((scale, shift))
    return layers, bns


if __name__ == "__main__":
    N = 64                 # number of graph nodes
    NUM1, NUM2 = 16, 8     # one-hot cardinalities of feat1 / feat2
    in_size = NUM1 + NUM2  # 24
    num_hidden = 32
    num_classes = 8

    key = jax.random.PRNGKey(0)
    kg, kf1, kf2, kp = jax.random.split(key, 4)

    # Graph construction: random edges -> AddReverse -> AddSelfLoop -> ToSimple (0/1 adj)
    adj = (jax.random.uniform(kg, (N, N)) < 0.08).astype(jnp.float32)
    adj = jnp.maximum(adj, adj.T)                              # AddReverse
    adj = jnp.maximum(adj, jnp.eye(N, dtype=jnp.float32))      # AddSelfLoop (+ ToSimple)
    a_norm = adj / jnp.sum(adj, axis=1, keepdims=True)         # row-normalize -> mean agg

    # Node features: one_hot(feat1) ++ one_hot(feat2), cast to float
    feat1 = jax.random.randint(kf1, (N,), 0, NUM1)
    feat2 = jax.random.randint(kf2, (N,), 0, NUM2)
    x = jnp.concatenate(
        [jax.nn.one_hot(feat1, NUM1), jax.nn.one_hot(feat2, NUM2)], axis=1
    ).astype(jnp.float32)

    layers, bns = init_params(kp, in_size, num_hidden, num_classes)
    prepped, nc = prepare_params(layers, bns)
    a_bf, x_bf = prepare_inputs(a_norm, x)   # done once per graph, outside hot path

    out = graphsage_forward(a_bf, x_bf, prepped, num_classes=nc)
    jax.block_until_ready(out)
    assert out.shape == (N, num_classes)
    assert out.dtype == jnp.float32
    assert bool(jnp.all(jnp.isfinite(out)))
    print("KERNEL_OK")
</pallas_src>

<mosaic_0001>
module attributes {stable_mosaic.version = 11 : i64} {
  func.func @fused_graphsage_kernel(%arg0: memref<64x64xbf16, #tpu.memory_space<vmem>>, %arg1: memref<64x128xbf16, #tpu.memory_space<vmem>>, %arg2: memref<128x128xbf16, #tpu.memory_space<vmem>>, %arg3: memref<128x128xbf16, #tpu.memory_space<vmem>>, %arg4: memref<128x128xbf16, #tpu.memory_space<vmem>>, %arg5: memref<128x128xbf16, #tpu.memory_space<vmem>>, %arg6: memref<128x128xbf16, #tpu.memory_space<vmem>>, %arg7: memref<128x128xbf16, #tpu.memory_space<vmem>>, %arg8: memref<1x128xf32, #tpu.memory_space<vmem>>, %arg9: memref<1x128xf32, #tpu.memory_space<vmem>>, %arg10: memref<1x128xf32, #tpu.memory_space<vmem>>, %arg11: memref<1x128xf32, #tpu.memory_space<vmem>>, %arg12: memref<1x128xf32, #tpu.memory_space<vmem>>, %arg13: memref<64x128xf32, #tpu.memory_space<vmem>>) attributes {dimension_semantics = [], scalar_prefetch = 0 : i64, scratch_operands = 0 : i64, tpu.core_type = #tpu.core_type<tc>} {
    %c0 = arith.constant 0 : index
    %c0_0 = arith.constant 0 : index
    %0 = vector.load %arg0[%c0, %c0_0] : memref<64x64xbf16, #tpu.memory_space<vmem>>, vector<64x64xbf16>
    %c0_1 = arith.constant 0 : index
    %c0_2 = arith.constant 0 : index
    %1 = vector.load %arg1[%c0_1, %c0_2] : memref<64x128xbf16, #tpu.memory_space<vmem>>, vector<64x128xbf16>
    %cst = arith.constant dense<0.000000e+00> : vector<64x128xf32>
    %2 = tpu.matmul %0, %1, %cst {dimension_numbers = #tpu.dot_dimension_numbers<[1], [0], [0], [1], [0, 0, 1, 1], [], []>} : vector<64x64xbf16>, vector<64x128xbf16>, vector<64x128xf32> -> vector<64x128xf32>
    %3 = arith.truncf %2 : vector<64x128xf32> to vector<64x128xbf16>
    %c0_3 = arith.constant 0 : index
    %c0_4 = arith.constant 0 : index
    %4 = vector.load %arg2[%c0_3, %c0_4] : memref<128x128xbf16, #tpu.memory_space<vmem>>, vector<128x128xbf16>
    %cst_5 = arith.constant dense<0.000000e+00> : vector<64x128xf32>
    %5 = tpu.matmul %1, %4, %cst_5 {dimension_numbers = #tpu.dot_dimension_numbers<[1], [0], [0], [1], [0, 0, 1, 1], [], []>} : vector<64x128xbf16>, vector<128x128xbf16>, vector<64x128xf32> -> vector<64x128xf32>
    %c0_6 = arith.constant 0 : index
    %c0_7 = arith.constant 0 : index
    %6 = vector.load %arg3[%c0_6, %c0_7] : memref<128x128xbf16, #tpu.memory_space<vmem>>, vector<128x128xbf16>
    %cst_8 = arith.constant dense<0.000000e+00> : vector<64x128xf32>
    %7 = tpu.matmul %3, %6, %cst_8 {dimension_numbers = #tpu.dot_dimension_numbers<[1], [0], [0], [1], [0, 0, 1, 1], [], []>} : vector<64x128xbf16>, vector<128x128xbf16>, vector<64x128xf32> -> vector<64x128xf32>
    %8 = arith.addf %5, %7 : vector<64x128xf32>
    %c0_9 = arith.constant 0 : index
    %c0_10 = arith.constant 0 : index
    %9 = vector.load %arg8[%c0_9, %c0_10] : memref<1x128xf32, #tpu.memory_space<vmem>>, vector<1x128xf32>
    %10 = vector.broadcast %9 : vector<1x128xf32> to vector<64x128xf32>
    %11 = arith.mulf %8, %10 : vector<64x128xf32>
    %c0_11 = arith.constant 0 : index
    %c0_12 = arith.constant 0 : index
    %12 = vector.load %arg9[%c0_11, %c0_12] : memref<1x128xf32, #tpu.memory_space<vmem>>, vector<1x128xf32>
    %13 = vector.broadcast %12 : vector<1x128xf32> to vector<64x128xf32>
    %14 = arith.addf %11, %13 : vector<64x128xf32>
    %cst_13 = arith.constant 0.000000e+00 : f32
    %15 = vector.broadcast %cst_13 : f32 to vector<64x128xf32>
    %16 = arith.maximumf %14, %15 : vector<64x128xf32>
    %17 = arith.truncf %16 : vector<64x128xf32> to vector<64x128xbf16>
    %cst_14 = arith.constant dense<0.000000e+00> : vector<64x128xf32>
    %18 = tpu.matmul %0, %17, %cst_14 {dimension_numbers = #tpu.dot_dimension_numbers<[1], [0], [0], [1], [0, 0, 1, 1], [], []>} : vector<64x64xbf16>, vector<64x128xbf16>, vector<64x128xf32> -> vector<64x128xf32>
    %19 = arith.truncf %18 : vector<64x128xf32> to vector<64x128xbf16>
    %c0_15 = arith.constant 0 : index
    %c0_16 = arith.constant 0 : index
    %20 = vector.load %arg4[%c0_15, %c0_16] : memref<128x128xbf16, #tpu.memory_space<vmem>>, vector<128x128xbf16>
    %cst_17 = arith.constant dense<0.000000e+00> : vector<64x128xf32>
    %21 = tpu.matmul %17, %20, %cst_17 {dimension_numbers = #tpu.dot_dimension_numbers<[1], [0], [0], [1], [0, 0, 1, 1], [], []>} : vector<64x128xbf16>, vector<128x128xbf16>, vector<64x128xf32> -> vector<64x128xf32>
    %c0_18 = arith.constant 0 : index
    %c0_19 = arith.constant 0 : index
    %22 = vector.load %arg5[%c0_18, %c0_19] : memref<128x128xbf16, #tpu.memory_space<vmem>>, vector<128x128xbf16>
    %cst_20 = arith.constant dense<0.000000e+00> : vector<64x128xf32>
    %23 = tpu.matmul %19, %22, %cst_20 {dimension_numbers = #tpu.dot_dimension_numbers<[1], [0], [0], [1], [0, 0, 1, 1], [], []>} : vector<64x128xbf16>, vector<128x128xbf16>, vector<64x128xf32> -> vector<64x128xf32>
    %24 = arith.addf %21, %23 : vector<64x128xf32>
    %c0_21 = arith.constant 0 : index
    %c0_22 = arith.constant 0 : index
    %25 = vector.load %arg10[%c0_21, %c0_22] : memref<1x128xf32, #tpu.memory_space<vmem>>, vector<1x128xf32>
    %26 = vector.broadcast %25 : vector<1x128xf32> to vector<64x128xf32>
    %27 = arith.mulf %24, %26 : vector<64x128xf32>
    %c0_23 = arith.constant 0 : index
    %c0_24 = arith.constant 0 : index
    %28 = vector.load %arg11[%c0_23, %c0_24] : memref<1x128xf32, #tpu.memory_space<vmem>>, vector<1x128xf32>
    %29 = vector.broadcast %28 : vector<1x128xf32> to vector<64x128xf32>
    %30 = arith.addf %27, %29 : vector<64x128xf32>
    %cst_25 = arith.constant 0.000000e+00 : f32
    %31 = vector.broadcast %cst_25 : f32 to vector<64x128xf32>
    %32 = arith.maximumf %30, %31 : vector<64x128xf32>
    %33 = arith.truncf %32 : vector<64x128xf32> to vector<64x128xbf16>
    %cst_26 = arith.constant dense<0.000000e+00> : vector<64x128xf32>
    %34 = tpu.matmul %0, %33, %cst_26 {dimension_numbers = #tpu.dot_dimension_numbers<[1], [0], [0], [1], [0, 0, 1, 1], [], []>} : vector<64x64xbf16>, vector<64x128xbf16>, vector<64x128xf32> -> vector<64x128xf32>
    %35 = arith.truncf %34 : vector<64x128xf32> to vector<64x128xbf16>
    %c0_27 = arith.constant 0 : index
    %c0_28 = arith.constant 0 : index
    %36 = vector.load %arg6[%c0_27, %c0_28] : memref<128x128xbf16, #tpu.memory_space<vmem>>, vector<128x128xbf16>
    %cst_29 = arith.constant dense<0.000000e+00> : vector<64x128xf32>
    %37 = tpu.matmul %33, %36, %cst_29 {dimension_numbers = #tpu.dot_dimension_numbers<[1], [0], [0], [1], [0, 0, 1, 1], [], []>} : vector<64x128xbf16>, vector<128x128xbf16>, vector<64x128xf32> -> vector<64x128xf32>
    %c0_30 = arith.constant 0 : index
    %c0_31 = arith.constant 0 : index
    %38 = vector.load %arg7[%c0_30, %c0_31] : memref<128x128xbf16, #tpu.memory_space<vmem>>, vector<128x128xbf16>
    %cst_32 = arith.constant dense<0.000000e+00> : vector<64x128xf32>
    %39 = tpu.matmul %35, %38, %cst_32 {dimension_numbers = #tpu.dot_dimension_numbers<[1], [0], [0], [1], [0, 0, 1, 1], [], []>} : vector<64x128xbf16>, vector<128x128xbf16>, vector<64x128xf32> -> vector<64x128xf32>
    %40 = arith.addf %37, %39 : vector<64x128xf32>
    %c0_33 = arith.constant 0 : index
    %c0_34 = arith.constant 0 : index
    %41 = vector.load %arg12[%c0_33, %c0_34] : memref<1x128xf32, #tpu.memory_space<vmem>>, vector<1x128xf32>
    %42 = vector.broadcast %41 : vector<1x128xf32> to vector<64x128xf32>
    %43 = arith.addf %40, %42 : vector<64x128xf32>
    %44 = tpu.iota {dimensions = array<i32: 1>} : vector<64x128xi32>
    %c8_i32 = arith.constant 8 : i32
    %45 = vector.broadcast %c8_i32 : i32 to vector<64x128xi32>
    %46 = arith.cmpi slt, %44, %45 : vector<64x128xi32>
    %cst_35 = arith.constant -1.000000e+30 : f32
    %47 = vector.broadcast %cst_35 : f32 to vector<64x128xf32>
    %48 = arith.select %46, %43, %47 : vector<64x128xi1>, vector<64x128xf32>
    %cst_36 = arith.constant dense<0xFF800000> : vector<64xf32>
    %49 = vector.multi_reduction <maximumf>, %48, %cst_36 [1] : vector<64x128xf32> to vector<64xf32>
    %50 = vector.shape_cast %49 : vector<64xf32> to vector<64x1xf32>
    %51 = vector.broadcast %50 : vector<64x1xf32> to vector<64x128xf32>
    %52 = arith.subf %48, %51 : vector<64x128xf32>
    %53 = math.exp %52 : vector<64x128xf32>
    %cst_37 = arith.constant dense<0.000000e+00> : vector<64xf32>
    %54 = vector.multi_reduction <add>, %53, %cst_37 [1] : vector<64x128xf32> to vector<64xf32>
    %55 = vector.shape_cast %54 : vector<64xf32> to vector<64x1xf32>
    %56 = math.log %55 : vector<64x1xf32>
    %57 = arith.addf %50, %56 : vector<64x1xf32>
    %58 = vector.broadcast %57 : vector<64x1xf32> to vector<64x128xf32>
    %59 = arith.subf %48, %58 : vector<64x128xf32>
    %c0_38 = arith.constant 0 : index
    %c0_39 = arith.constant 0 : index
    %60 = vector.load %arg13[%c0_38, %c0_39] : memref<64x128xf32, #tpu.memory_space<vmem>>, vector<64x128xf32>
    tpu.vector_store %arg13[%c0_38, %c0_39], %59 {strides = array<i32>} : memref<64x128xf32, #tpu.memory_space<vmem>>, vector<64x128xf32>,
    return
  }
}

</mosaic_0001>

<llo_original>
// kernel: graphsage_forward.1
$region0: #{graphsage_forward.1}
  #allocation0 [shape = 'u32[]', space=smem, size = 0x4, offset = 0x4, fixed_abs, tag = 'smem constant byte address 0x4 - core index']
  #allocation1 [shape = 'u32[72,128]{1,0:T(1,128)}', space=vmem, size = 0x9000, scoped, tag = 'internal scratch']
  %s0 = inlined_call_operand.hbm [shape: bf16[64,64], index: 0, kind: input, shape index: {}]
  %s1 = inlined_call_operand.hbm [shape: bf16[64,128], index: 1, kind: input, shape index: {}]
  %s2 = inlined_call_operand.hbm [shape: bf16[128,128], index: 2, kind: input, shape index: {}]
  %s3 = inlined_call_operand.hbm [shape: bf16[128,128], index: 3, kind: input, shape index: {}]
  %s4 = inlined_call_operand.hbm [shape: bf16[128,128], index: 4, kind: input, shape index: {}]
  %s5 = inlined_call_operand.hbm [shape: bf16[128,128], index: 5, kind: input, shape index: {}]
  %s6 = inlined_call_operand.hbm [shape: bf16[128,128], index: 6, kind: input, shape index: {}]
  %s7 = inlined_call_operand.hbm [shape: bf16[128,128], index: 7, kind: input, shape index: {}]
  %s8 = inlined_call_operand.vmem [shape: f32[1,128], index: 8, kind: input, shape index: {}]
  %s9 = inlined_call_operand.vmem [shape: f32[1,128], index: 9, kind: input, shape index: {}]
  %s10 = inlined_call_operand.vmem [shape: f32[1,128], index: 10, kind: input, shape index: {}]
  %s11 = inlined_call_operand.vmem [shape: f32[1,128], index: 11, kind: input, shape index: {}]
  %s12 = inlined_call_operand.vmem [shape: f32[1,128], index: 12, kind: input, shape index: {}]
  %s13 = inlined_call_operand.vmem [shape: f32[64,128], index: 13, kind: output, shape index: {}]
  %s14 = sld [smem:[#allocation0]]
  $region94: #{graphsage_forward.1} parent=0
    _
  %s16 = ssub.s32 1, %s14
  %s17 = scalar_select 0, %s16, %s14
  $region1: #{graphsage_forward.1} parent=0
    #allocation2 [shape = 'u8[16384]{0}', space=vmem, size = 0x4000, scoped, tag = 'input window, operand 0, single buffered']
    #allocation3 [shape = 's32[1]{0}', space=sflag, size = 0x4, scoped, tag = 'scoped memory for graphsage_forward.1']
    #allocation4 [shape = 'u8[16384]{0}', space=vmem, size = 0x4000, scoped, tag = 'input window, operand 1, single buffered']
    #allocation5 [shape = 's32[1]{0}', space=sflag, size = 0x4, scoped, tag = 'scoped memory for graphsage_forward.1']
    #allocation6 [shape = 'u8[32768]{0}', space=vmem, size = 0x8000, scoped, tag = 'input window, operand 2, single buffered']
    #allocation7 [shape = 'u8[32768]{0}', space=vmem, size = 0x8000, scoped, tag = 'input window, operand 3, single buffered']
    #allocation8 [shape = 's32[1]{0}', space=sflag, size = 0x4, scoped, tag = 'scoped memory for graphsage_forward.1']
    #allocation9 [shape = 'u8[32768]{0}', space=vmem, size = 0x8000, scoped, tag = 'input window, operand 4, single buffered']
    #allocation10 [shape = 'u8[32768]{0}', space=vmem, size = 0x8000, scoped, tag = 'input window, operand 5, single buffered']
    #allocation11 [shape = 's32[1]{0}', space=sflag, size = 0x4, scoped, tag = 'scoped memory for graphsage_forward.1']
    #allocation12 [shape = 'u8[32768]{0}', space=vmem, size = 0x8000, scoped, tag = 'input window, operand 6, single buffered']
    #allocation13 [shape = 'u8[32768]{0}', space=vmem, size = 0x8000, scoped, tag = 'input window, operand 7, single buffered']
    #allocation14 [shape = 's32[1]{0}', space=sflag, size = 0x4, scoped, tag = 'scoped memory for graphsage_forward.1']
    %18 = vsyncpa [#allocation3], 0
    %19 = vsyncpa [#allocation5], 0
    %20 = vsyncpa [#allocation8], 0
    %21 = vsyncpa [#allocation11], 0
    %22 = vsyncpa [#allocation14], 0
    // Predicated region
    $region2: #{graphsage_forward.1} parent=1 // pred_check
      _
    $region3: #{graphsage_forward.1} parent=1 // pred_check_branch
      %24 = sbr.rel (0) target = $region5
    $region4: #{graphsage_forward.1} parent=1 // pred_region
      %26 = vsyncadd [#allocation3], 0
      %s27 = sshll.u32 %s0, 4
      %s28 = int_to_ptr.hbm [resolvable:$true] %s27
      %s29 = sshll.u32 [#allocation2], 4
      %s30 = int_to_ptr.vmem [resolvable:$true] %s29
      %35 = dma.hbm_to_vmem [thread:$0]  %s28, 512, %s30, [#allocation3], 64, 64, 4
    $region5: #{graphsage_forward.1} parent=1 // pred_fallthru
      _
    // Predicated region
    $region6: #{graphsage_forward.1} parent=1 // pred_check
      _
    $region7: #{graphsage_forward.1} parent=1 // pred_check_branch
      %37 = sbr.rel (0) target = $region9
    $region8: #{graphsage_forward.1} parent=1 // pred_region
      %39 = vsyncadd [#allocation5], 0
      %s40 = sshll.u32 %s1, 4
      %s41 = int_to_ptr.hbm [resolvable:$true] %s40
      %s42 = sshll.u32 [#allocation4], 4
      %s43 = int_to_ptr.vmem [resolvable:$true] %s42
      %48 = dma.hbm_to_vmem [thread:$0]  %s41, 512, %s43, [#allocation5], 64, 64, 4
    $region9: #{graphsage_forward.1} parent=1 // pred_fallthru
      _
    // Predicated region
    $region10: #{graphsage_forward.1} parent=1 // pred_check
      _
    $region11: #{graphsage_forward.1} parent=1 // pred_check_branch
      %50 = sbr.rel (0) target = $region13
    $region12: #{graphsage_forward.1} parent=1 // pred_region
      %52 = vsyncadd [#allocation5], 0
      %s53 = sshll.u32 %s2, 4
      %s54 = int_to_ptr.hbm [resolvable:$true] %s53
      %s55 = sshll.u32 [#allocation6], 4
      %s56 = int_to_ptr.vmem [resolvable:$true] %s55
      %61 = dma.hbm_to_vmem [thread:$0]  %s54, 1024, %s56, [#allocation5], 64, 64, 4
    $region13: #{graphsage_forward.1} parent=1 // pred_fallthru
      _
    // Predicated region
    $region14: #{graphsage_forward.1} parent=1 // pred_check
      _
    $region15: #{graphsage_forward.1} parent=1 // pred_check_branch
      %63 = sbr.rel (0) target = $region17
    $region16: #{graphsage_forward.1} parent=1 // pred_region
      %65 = vsyncadd [#allocation8], 0
      %s66 = sshll.u32 %s3, 4
      %s67 = int_to_ptr.hbm [resolvable:$true] %s66
      %s68 = sshll.u32 [#allocation7], 4
      %s69 = int_to_ptr.vmem [resolvable:$true] %s68
      %74 = dma.hbm_to_vmem [thread:$0]  %s67, 1024, %s69, [#allocation8], 64, 64, 4
    $region17: #{graphsage_forward.1} parent=1 // pred_fallthru
      _
    // Predicated region
    $region18: #{graphsage_forward.1} parent=1 // pred_check
      _
    $region19: #{graphsage_forward.1} parent=1 // pred_check_branch
      %76 = sbr.rel (0) target = $region21
    $region20: #{graphsage_forward.1} parent=1 // pred_region
      %78 = vsyncadd [#allocation8], 0
      %s79 = sshll.u32 %s4, 4
      %s80 = int_to_ptr.hbm [resolvable:$true] %s79
      %s81 = sshll.u32 [#allocation9], 4
      %s82 = int_to_ptr.vmem [resolvable:$true] %s81
      %87 = dma.hbm_to_vmem [thread:$0]  %s80, 1024, %s82, [#allocation8], 64, 64, 4
    $region21: #{graphsage_forward.1} parent=1 // pred_fallthru
      _
    // Predicated region
    $region22: #{graphsage_forward.1} parent=1 // pred_check
      _
    $region23: #{graphsage_forward.1} parent=1 // pred_check_branch
      %89 = sbr.rel (0) target = $region25
    $region24: #{graphsage_forward.1} parent=1 // pred_region
      %91 = vsyncadd [#allocation11], 0
      %s92 = sshll.u32 %s5, 4
      %s93 = int_to_ptr.hbm [resolvable:$true] %s92
      %s94 = sshll.u32 [#allocation10], 4
      %s95 = int_to_ptr.vmem [resolvable:$true] %s94
      %100 = dma.hbm_to_vmem [thread:$0]  %s93, 1024, %s95, [#allocation11], 64, 64, 4
    $region25: #{graphsage_forward.1} parent=1 // pred_fallthru
      _
    // Predicated region
    $region26: #{graphsage_forward.1} parent=1 // pred_check
      _
    $region27: #{graphsage_forward.1} parent=1 // pred_check_branch
      %102 = sbr.rel (0) target = $region29
    $region28: #{graphsage_forward.1} parent=1 // pred_region
      %104 = vsyncadd [#allocation11], 0
      %s105 = sshll.u32 %s6, 4
      %s106 = int_to_ptr.hbm [resolvable:$true] %s105
      %s107 = sshll.u32 [#allocation12], 4
      %s108 = int_to_ptr.vmem [resolvable:$true] %s107
      %113 = dma.hbm_to_vmem [thread:$0]  %s106, 1024, %s108, [#allocation11], 64, 64, 4
    $region29: #{graphsage_forward.1} parent=1 // pred_fallthru
      _
    // Predicated region
    $region30: #{graphsage_forward.1} parent=1 // pred_check
      _
    $region31: #{graphsage_forward.1} parent=1 // pred_check_branch
      %115 = sbr.rel (0) target = $region33
    $region32: #{graphsage_forward.1} parent=1 // pred_region
      %117 = vsyncadd [#allocation14], 0
      %s118 = sshll.u32 %s7, 4
      %s119 = int_to_ptr.hbm [resolvable:$true] %s118
      %s120 = sshll.u32 [#allocation13], 4
      %s121 = int_to_ptr.vmem [resolvable:$true] %s120
      %126 = dma.hbm_to_vmem [thread:$0]  %s119, 1024, %s121, [#allocation14], 64, 64, 4
    $region33: #{graphsage_forward.1} parent=1 // pred_fallthru
      _
    // Predicated region
    $region34: #{graphsage_forward.1} parent=1 // pred_check
      _
    $region35: #{graphsage_forward.1} parent=1 // pred_check_branch
      %128 = sbr.rel (0) target = $region37
    $region36: #{graphsage_forward.1} parent=1 // pred_region
      _
    $region37: #{graphsage_forward.1} parent=1 // pred_fallthru
      _
    // Predicated region
    $region38: #{graphsage_forward.1} parent=1 // pred_check
      _
    $region39: #{graphsage_forward.1} parent=1 // pred_check_branch
      %130 = sbr.rel (0) target = $region41
    $region40: #{graphsage_forward.1} parent=1 // pred_region
      _
    $region41: #{graphsage_forward.1} parent=1 // pred_fallthru
      _
    // Predicated region
    $region42: #{graphsage_forward.1} parent=1 // pred_check
      _
    $region43: #{graphsage_forward.1} parent=1 // pred_check_branch
      %132 = sbr.rel (0) target = $region45
    $region44: #{graphsage_forward.1} parent=1 // pred_region
      _
    $region45: #{graphsage_forward.1} parent=1 // pred_fallthru
      _
    // Predicated region
    $region46: #{graphsage_forward.1} parent=1 // pred_check
      _
    $region47: #{graphsage_forward.1} parent=1 // pred_check_branch
      %134 = sbr.rel (0) target = $region49
    $region48: #{graphsage_forward.1} parent=1 // pred_region
      _
    $region49: #{graphsage_forward.1} parent=1 // pred_fallthru
      _
    // Predicated region
    $region50: #{graphsage_forward.1} parent=1 // pred_check
      _
    $region51: #{graphsage_forward.1} parent=1 // pred_check_branch
      %136 = sbr.rel (0) target = $region53
    $region52: #{graphsage_forward.1} parent=1 // pred_region
      _
    $region53: #{graphsage_forward.1} parent=1 // pred_fallthru
      _
    // Predicated region
    $region54: #{graphsage_forward.1} parent=1 // pred_check
      _
    $region55: #{graphsage_forward.1} parent=1 // pred_check_branch
      %138 = sbr.rel (0) target = $region57
    $region56: #{graphsage_forward.1} parent=1 // pred_region
      %140 = dma.done [#allocation3], 512
    $region57: #{graphsage_forward.1} parent=1 // pred_fallthru
      _
    // Predicated region
    $region58: #{graphsage_forward.1} parent=1 // pred_check
      _
    $region59: #{graphsage_forward.1} parent=1 // pred_check_branch
      %142 = sbr.rel (0) target = $region61
    $region60: #{graphsage_forward.1} parent=1 // pred_region
      %144 = dma.done [#allocation5], 512
    $region61: #{graphsage_forward.1} parent=1 // pred_fallthru
      _
    // Predicated region
    $region62: #{graphsage_forward.1} parent=1 // pred_check
      _
    $region63: #{graphsage_forward.1} parent=1 // pred_check_branch
      %146 = sbr.rel (0) target = $region65
    $region64: #{graphsage_forward.1} parent=1 // pred_region
      %148 = dma.done [#allocation5], 1024
    $region65: #{graphsage_forward.1} parent=1 // pred_fallthru
      _
    // Predicated region
    $region66: #{graphsage_forward.1} parent=1 // pred_check
      _
    $region67: #{graphsage_forward.1} parent=1 // pred_check_branch
      %150 = sbr.rel (0) target = $region69
    $region68: #{graphsage_forward.1} parent=1 // pred_region
      %152 = dma.done [#allocation8], 1024
    $region69: #{graphsage_forward.1} parent=1 // pred_fallthru
      _
    // Predicated region
    $region70: #{graphsage_forward.1} parent=1 // pred_check
      _
    $region71: #{graphsage_forward.1} parent=1 // pred_check_branch
      %154 = sbr.rel (0) target = $region73
    $region72: #{graphsage_forward.1} parent=1 // pred_region
      %156 = dma.done [#allocation8], 1024
    $region73: #{graphsage_forward.1} parent=1 // pred_fallthru
      _
    // Predicated region
    $region74: #{graphsage_forward.1} parent=1 // pred_check
      _
    $region75: #{graphsage_forward.1} parent=1 // pred_check_branch
      %158 = sbr.rel (0) target = $region77
    $region76: #{graphsage_forward.1} parent=1 // pred_region
      %160 = dma.done [#allocation11], 1024
    $region77: #{graphsage_forward.1} parent=1 // pred_fallthru
      _
    // Predicated region
    $region78: #{graphsage_forward.1} parent=1 // pred_check
      _
    $region79: #{graphsage_forward.1} parent=1 // pred_check_branch
      %162 = sbr.rel (0) target = $region81
    $region80: #{graphsage_forward.1} parent=1 // pred_region
      %164 = dma.done [#allocation11], 1024
    $region81: #{graphsage_forward.1} parent=1 // pred_fallthru
      _
    // Predicated region
    $region82: #{graphsage_forward.1} parent=1 // pred_check
      _
    $region83: #{graphsage_forward.1} parent=1 // pred_check_branch
      %166 = sbr.rel (0) target = $region85
    $region84: #{graphsage_forward.1} parent=1 // pred_region
      %168 = dma.done [#allocation14], 1024
    $region85: #{graphsage_forward.1} parent=1 // pred_fallthru
      _
    %v170 = vld [vmem:[#allocation2] sm:$0xf]
    %v171 = vld [vmem:[#allocation2 + $0x4] sm:$0xf]
    %v172 = vld [vmem:[#allocation2 + $0x8] sm:$0xf]
    %v173 = vld [vmem:[#allocation2 + $0xc] sm:$0xf]
    %v174 = vld [vmem:[#allocation2 + $0x10] sm:$0xf]
    %v175 = vld [vmem:[#allocation2 + $0x14] sm:$0xf]
    %v176 = vld [vmem:[#allocation2 + $0x18] sm:$0xf]
    %v177 = vld [vmem:[#allocation2 + $0x1c] sm:$0xf]
    %v178 = vld [vmem:[#allocation4] sm:$0xf]
    %v179 = vld [vmem:[#allocation4 + $0x4] sm:$0xf]
    %v180 = vld [vmem:[#allocation4 + $0x8] sm:$0xf]
    %v181 = vld [vmem:[#allocation4 + $0xc] sm:$0xf]
    %v182 = vld [vmem:[#allocation4 + $0x10] sm:$0xf]
    %v183 = vld [vmem:[#allocation4 + $0x14] sm:$0xf]
    %v184 = vld [vmem:[#allocation4 + $0x18] sm:$0xf]
    %v185 = vld [vmem:[#allocation4 + $0x1c] sm:$0xf]
    %v194 = vunpack.c.l.b16 %v170
    %v195 = vunpack.c.l.b16 %v171
    %v196 = vunpack.c.l.b16 %v172
    %v197 = vunpack.c.l.b16 %v173
    %v198 = vunpack.c.l.b16 %v174
    %v199 = vunpack.c.l.b16 %v175
    %v200 = vunpack.c.l.b16 %v176
    %v201 = vunpack.c.l.b16 %v177
    %v202 = vpack.c.b16 %v195, %v194
    %v203 = vpack.c.b16 %v197, %v196
    %v204 = vpack.c.b16 %v199, %v198
    %v205 = vpack.c.b16 %v201, %v200
    %v214 = vunpack.c.l.b16 %v178
    %v215 = vunpack.c.l.b16 %v179
    %v216 = vunpack.c.l.b16 %v180
    %v217 = vunpack.c.l.b16 %v181
    %v218 = vunpack.c.l.b16 %v182
    %v219 = vunpack.c.l.b16 %v183
    %v220 = vunpack.c.l.b16 %v184
    %v221 = vunpack.c.l.b16 %v185
    %v222 = vpack.c.b16 %v215, %v214
    %v223 = vpack.c.b16 %v217, %v216
    %v224 = vpack.c.b16 %v219, %v218
    %v225 = vpack.c.b16 %v221, %v220
    %vm230 = vcmask 523264
    %v232 = vsel %vm230, %v202, 0
    %v235 = vsel %vm230, %v203, 0
    %v238 = vsel %vm230, %v204, 0
    %v241 = vsel %vm230, %v205, 0
    %243 = vmatpush.bf16.msra.mxu0 0
    %244 = vmatpush.bf16.msra.mxu0 0
    %245 = vmatpush.bf16.msra.mxu0 0
    %246 = vmatpush.bf16.msra.mxu0 0
    %247 = vmatpush.bf16.msra.mxu0 %v225
    %248 = vmatpush.bf16.msra.mxu0 %v224
    %249 = vmatpush.bf16.msra.mxu0 %v223
    %250 = vmatpush.bf16.msra.mxu0 %v222
    %251 = vmatmul.bf16.gmra.mxu0 %v232
    %v252 = vpop.f32.mrf.mxu0
    %v253 = vadd.f32 0.0, %v252
    %v254 = vpop.f32.mrf.mxu0
    %v255 = vadd.f32 0.0, %v254
    %256 = vmatmul.bf16.gmra.mxu0 %v235
    %v257 = vpop.f32.mrf.mxu0
    %v258 = vadd.f32 0.0, %v257
    %v259 = vpop.f32.mrf.mxu0
    %v260 = vadd.f32 0.0, %v259
    %261 = vmatmul.bf16.gmra.mxu0 %v238
    %v262 = vpop.f32.mrf.mxu0
    %v263 = vadd.f32 0.0, %v262
    %v264 = vpop.f32.mrf.mxu0
    %v265 = vadd.f32 0.0, %v264
    %266 = vmatmul.bf16.gmra.mxu0 %v241
    %v267 = vpop.f32.mrf.mxu0
    %v268 = vadd.f32 0.0, %v267
    %v269 = vpop.f32.mrf.mxu0
    %v270 = vadd.f32 0.0, %v269
    %271 = vdwg.mxu0
    %v272 = vpack.c.bf16 %v255, %v253
    %v273 = vpack.c.bf16 %v260, %v258
    %v274 = vpack.c.bf16 %v265, %v263
    %v275 = vpack.c.bf16 %v270, %v268
    %v276 = vld [vmem:[#allocation6] sm:$0xf]
    %v277 = vld [vmem:[#allocation6 + $0x4] sm:$0xf]
    %v278 = vld [vmem:[#allocation6 + $0x8] sm:$0xf]
    %v279 = vld [vmem:[#allocation6 + $0xc] sm:$0xf]
    %v280 = vld [vmem:[#allocation6 + $0x10] sm:$0xf]
    %v281 = vld [vmem:[#allocation6 + $0x14] sm:$0xf]
    %v282 = vld [vmem:[#allocation6 + $0x18] sm:$0xf]
    %v283 = vld [vmem:[#allocation6 + $0x1c] sm:$0xf]
    %v284 = vld [vmem:[#allocation6 + $0x20] sm:$0xf]
    %v285 = vld [vmem:[#allocation6 + $0x24] sm:$0xf]
    %v286 = vld [vmem:[#allocation6 + $0x28] sm:$0xf]
    %v287 = vld [vmem:[#allocation6 + $0x2c] sm:$0xf]
    %v288 = vld [vmem:[#allocation6 + $0x30] sm:$0xf]
    %v289 = vld [vmem:[#allocation6 + $0x34] sm:$0xf]
    %v290 = vld [vmem:[#allocation6 + $0x38] sm:$0xf]
    %v291 = vld [vmem:[#allocation6 + $0x3c] sm:$0xf]
    %v292 = vld [vmem:[#allocation7] sm:$0xf]
    %v293 = vld [vmem:[#allocation7 + $0x4] sm:$0xf]
    %v294 = vld [vmem:[#allocation7 + $0x8] sm:$0xf]
    %v295 = vld [vmem:[#allocation7 + $0xc] sm:$0xf]
    %v296 = vld [vmem:[#allocation7 + $0x10] sm:$0xf]
    %v297 = vld [vmem:[#allocation7 + $0x14] sm:$0xf]
    %v298 = vld [vmem:[#allocation7 + $0x18] sm:$0xf]
    %v299 = vld [vmem:[#allocation7 + $0x1c] sm:$0xf]
    %v300 = vld [vmem:[#allocation7 + $0x20] sm:$0xf]
    %v301 = vld [vmem:[#allocation7 + $0x24] sm:$0xf]
    %v302 = vld [vmem:[#allocation7 + $0x28] sm:$0xf]
    %v303 = vld [vmem:[#allocation7 + $0x2c] sm:$0xf]
    %v304 = vld [vmem:[#allocation7 + $0x30] sm:$0xf]
    %v305 = vld [vmem:[#allocation7 + $0x34] sm:$0xf]
    %v306 = vld [vmem:[#allocation7 + $0x38] sm:$0xf]
    %v307 = vld [vmem:[#allocation7 + $0x3c] sm:$0xf]
    %v324 = vunpack.c.l.b16 %v292
    %v325 = vunpack.c.l.b16 %v293
    %v326 = vunpack.c.l.b16 %v294
    %v327 = vunpack.c.l.b16 %v295
    %v328 = vunpack.c.l.b16 %v296
    %v329 = vunpack.c.l.b16 %v297
    %v330 = vunpack.c.l.b16 %v298
    %v331 = vunpack.c.l.b16 %v299
    %v332 = vunpack.c.l.b16 %v300
    %v333 = vunpack.c.l.b16 %v301
    %v334 = vunpack.c.l.b16 %v302
    %v335 = vunpack.c.l.b16 %v303
    %v336 = vunpack.c.l.b16 %v304
    %v337 = vunpack.c.l.b16 %v305
    %v338 = vunpack.c.l.b16 %v306
    %v339 = vunpack.c.l.b16 %v307
    %v340 = vpack.c.b16 %v325, %v324
    %v341 = vpack.c.b16 %v327, %v326
    %v342 = vpack.c.b16 %v329, %v328
    %v343 = vpack.c.b16 %v331, %v330
    %v344 = vpack.c.b16 %v333, %v332
    %v345 = vpack.c.b16 %v335, %v334
    %v346 = vpack.c.b16 %v337, %v336
    %v347 = vpack.c.b16 %v339, %v338
    %356 = vmatpush.bf16.msra.mxu0 %v347
    %357 = vmatpush.bf16.msra.mxu0 %v346
    %358 = vmatpush.bf16.msra.mxu0 %v345
    %359 = vmatpush.bf16.msra.mxu0 %v344
    %360 = vmatpush.bf16.msra.mxu0 %v343
    %361 = vmatpush.bf16.msra.mxu0 %v342
    %362 = vmatpush.bf16.msra.mxu0 %v341
    %363 = vmatpush.bf16.msra.mxu0 %v340
    %364 = vmatmul.bf16.gmra.mxu0 %v272
    %v365 = vpop.f32.mrf.mxu0
    %v366 = vadd.f32 0.0, %v365
    %v367 = vpop.f32.mrf.mxu0
    %v368 = vadd.f32 0.0, %v367
    %369 = vmatmul.bf16.gmra.mxu0 %v273
    %v370 = vpop.f32.mrf.mxu0
    %v371 = vadd.f32 0.0, %v370
    %v372 = vpop.f32.mrf.mxu0
    %v373 = vadd.f32 0.0, %v372
    %374 = vmatmul.bf16.gmra.mxu0 %v274
    %v375 = vpop.f32.mrf.mxu0
    %v376 = vadd.f32 0.0, %v375
    %v377 = vpop.f32.mrf.mxu0
    %v378 = vadd.f32 0.0, %v377
    %379 = vmatmul.bf16.gmra.mxu0 %v275
    %v380 = vpop.f32.mrf.mxu0
    %v381 = vadd.f32 0.0, %v380
    %v382 = vpop.f32.mrf.mxu0
    %v383 = vadd.f32 0.0, %v382
    %384 = vdwg.mxu0
    %v401 = vunpack.c.l.b16 %v276
    %v402 = vunpack.c.l.b16 %v277
    %v403 = vunpack.c.l.b16 %v278
    %v404 = vunpack.c.l.b16 %v279
    %v405 = vunpack.c.l.b16 %v280
    %v406 = vunpack.c.l.b16 %v281
    %v407 = vunpack.c.l.b16 %v282
    %v408 = vunpack.c.l.b16 %v283
    %v409 = vunpack.c.l.b16 %v284
    %v410 = vunpack.c.l.b16 %v285
    %v411 = vunpack.c.l.b16 %v286
    %v412 = vunpack.c.l.b16 %v287
    %v413 = vunpack.c.l.b16 %v288
    %v414 = vunpack.c.l.b16 %v289
    %v415 = vunpack.c.l.b16 %v290
    %v416 = vunpack.c.l.b16 %v291
    %v417 = vpack.c.b16 %v402, %v401
    %v418 = vpack.c.b16 %v404, %v403
    %v419 = vpack.c.b16 %v406, %v405
    %v420 = vpack.c.b16 %v408, %v407
    %v421 = vpack.c.b16 %v410, %v409
    %v422 = vpack.c.b16 %v412, %v411
    %v423 = vpack.c.b16 %v414, %v413
    %v424 = vpack.c.b16 %v416, %v415
    %433 = vmatpush.bf16.msra.mxu0 %v424
    %434 = vmatpush.bf16.msra.mxu0 %v423
    %435 = vmatpush.bf16.msra.mxu0 %v422
    %436 = vmatpush.bf16.msra.mxu0 %v421
    %437 = vmatpush.bf16.msra.mxu0 %v420
    %438 = vmatpush.bf16.msra.mxu0 %v419
    %439 = vmatpush.bf16.msra.mxu0 %v418
    %440 = vmatpush.bf16.msra.mxu0 %v417
    %441 = vmatmul.bf16.gmra.mxu0 %v222
    %v442 = vpop.f32.mrf.mxu0
    %v443 = vadd.f32 %v366, %v442
    %v444 = vpop.f32.mrf.mxu0
    %v445 = vadd.f32 %v368, %v444
    %446 = vmatmul.bf16.gmra.mxu0 %v223
    %v447 = vpop.f32.mrf.mxu0
    %v448 = vadd.f32 %v371, %v447
    %v449 = vpop.f32.mrf.mxu0
    %v450 = vadd.f32 %v373, %v449
    %451 = vmatmul.bf16.gmra.mxu0 %v224
    %v452 = vpop.f32.mrf.mxu0
    %v453 = vadd.f32 %v376, %v452
    %v454 = vpop.f32.mrf.mxu0
    %v455 = vadd.f32 %v378, %v454
    %456 = vmatmul.bf16.gmra.mxu0 %v225
    %v457 = vpop.f32.mrf.mxu0
    %v458 = vadd.f32 %v381, %v457
    %v459 = vpop.f32.mrf.mxu0
    %v460 = vadd.f32 %v383, %v459
    %461 = vdwg.mxu0
    %v462 = vld [vmem:[%s8] sm:$0x1]
    %v464 = vperm.slane %v462, 0
    %v466 = vmul.f32 %v443, %v464
    %v467 = vmul.f32 %v445, %v464
    %v468 = vmul.f32 %v448, %v464
    %v469 = vmul.f32 %v450, %v464
    %v470 = vmul.f32 %v453, %v464
    %v471 = vmul.f32 %v455, %v464
    %v472 = vmul.f32 %v458, %v464
    %v473 = vmul.f32 %v460, %v464
    %v474 = vld [vmem:[%s9] sm:$0x1]
    %v476 = vperm.slane %v474, 0
    %v478 = vadd.f32 %v466, %v476
    %v479 = vadd.f32 %v467, %v476
    %v480 = vadd.f32 %v468, %v476
    %v481 = vadd.f32 %v469, %v476
    %v482 = vadd.f32 %v470, %v476
    %v483 = vadd.f32 %v471, %v476
    %v484 = vadd.f32 %v472, %v476
    %v485 = vadd.f32 %v473, %v476
    %v486 = vmax.f32 %v478, 0.0
    %v487 = vmax.f32 %v479, 0.0
    %v488 = vmax.f32 %v480, 0.0
    %v489 = vmax.f32 %v481, 0.0
    %v490 = vmax.f32 %v482, 0.0
    %v491 = vmax.f32 %v483, 0.0
    %v492 = vmax.f32 %v484, 0.0
    %v493 = vmax.f32 %v485, 0.0
    %v494 = vpack.c.bf16 %v487, %v486
    %v495 = vpack.c.bf16 %v489, %v488
    %v496 = vpack.c.bf16 %v491, %v490
    %v497 = vpack.c.bf16 %v493, %v492
    %498 = vmatpush.bf16.msra.mxu0 0
    %499 = vmatpush.bf16.msra.mxu0 0
    %500 = vmatpush.bf16.msra.mxu0 0
    %501 = vmatpush.bf16.msra.mxu0 0
    %502 = vmatpush.bf16.msra.mxu0 %v497
    %503 = vmatpush.bf16.msra.mxu0 %v496
    %504 = vmatpush.bf16.msra.mxu0 %v495
    %505 = vmatpush.bf16.msra.mxu0 %v494
    %506 = vmatmul.bf16.gmra.mxu0 %v232
    %v507 = vpop.f32.mrf.mxu0
    %v508 = vadd.f32 0.0, %v507
    %v509 = vpop.f32.mrf.mxu0
    %v510 = vadd.f32 0.0, %v509
    %511 = vmatmul.bf16.gmra.mxu0 %v235
    %v512 = vpop.f32.mrf.mxu0
    %v513 = vadd.f32 0.0, %v512
    %v514 = vpop.f32.mrf.mxu0
    %v515 = vadd.f32 0.0, %v514
    %516 = vmatmul.bf16.gmra.mxu0 %v238
    %v517 = vpop.f32.mrf.mxu0
    %v518 = vadd.f32 0.0, %v517
    %v519 = vpop.f32.mrf.mxu0
    %v520 = vadd.f32 0.0, %v519
    %521 = vmatmul.bf16.gmra.mxu0 %v241
    %v522 = vpop.f32.mrf.mxu0
    %v523 = vadd.f32 0.0, %v522
    %v524 = vpop.f32.mrf.mxu0
    %v525 = vadd.f32 0.0, %v524
    %526 = vdwg.mxu0
    %v527 = vpack.c.bf16 %v510, %v508
    %v528 = vpack.c.bf16 %v515, %v513
    %v529 = vpack.c.bf16 %v520, %v518
    %v530 = vpack.c.bf16 %v525, %v523
    %v531 = vld [vmem:[#allocation9] sm:$0xf]
    %v532 = vld [vmem:[#allocation9 + $0x4] sm:$0xf]
    %v533 = vld [vmem:[#allocation9 + $0x8] sm:$0xf]
    %v534 = vld [vmem:[#allocation9 + $0xc] sm:$0xf]
    %v535 = vld [vmem:[#allocation9 + $0x10] sm:$0xf]
    %v536 = vld [vmem:[#allocation9 + $0x14] sm:$0xf]
    %v537 = vld [vmem:[#allocation9 + $0x18] sm:$0xf]
    %v538 = vld [vmem:[#allocation9 + $0x1c] sm:$0xf]
    %v539 = vld [vmem:[#allocation9 + $0x20] sm:$0xf]
    %v540 = vld [vmem:[#allocation9 + $0x24] sm:$0xf]
    %v541 = vld [vmem:[#allocation9 + $0x28] sm:$0xf]
    %v542 = vld [vmem:[#allocation9 + $0x2c] sm:$0xf]
    %v543 = vld [vmem:[#allocation9 + $0x30] sm:$0xf]
    %v544 = vld [vmem:[#allocation9 + $0x34] sm:$0xf]
    %v545 = vld [vmem:[#allocation9 + $0x38] sm:$0xf]
    %v546 = vld [vmem:[#allocation9 + $0x3c] sm:$0xf]
    %v547 = vld [vmem:[#allocation10] sm:$0xf]
    %v548 = vld [vmem:[#allocation10 + $0x4] sm:$0xf]
    %v549 = vld [vmem:[#allocation10 + $0x8] sm:$0xf]
    %v550 = vld [vmem:[#allocation10 + $0xc] sm:$0xf]
    %v551 = vld [vmem:[#allocation10 + $0x10] sm:$0xf]
    %v552 = vld [vmem:[#allocation10 + $0x14] sm:$0xf]
    %v553 = vld [vmem:[#allocation10 + $0x18] sm:$0xf]
    %v554 = vld [vmem:[#allocation10 + $0x1c] sm:$0xf]
    %v555 = vld [vmem:[#allocation10 + $0x20] sm:$0xf]
    %v556 = vld [vmem:[#allocation10 + $0x24] sm:$0xf]
    %v557 = vld [vmem:[#allocation10 + $0x28] sm:$0xf]
    %v558 = vld [vmem:[#allocation10 + $0x2c] sm:$0xf]
    %v559 = vld [vmem:[#allocation10 + $0x30] sm:$0xf]
    %v560 = vld [vmem:[#allocation10 + $0x34] sm:$0xf]
    %v561 = vld [vmem:[#allocation10 + $0x38] sm:$0xf]
    %v562 = vld [vmem:[#allocation10 + $0x3c] sm:$0xf]
    %v579 = vunpack.c.l.b16 %v547
    %v580 = vunpack.c.l.b16 %v548
    %v581 = vunpack.c.l.b16 %v549
    %v582 = vunpack.c.l.b16 %v550
    %v583 = vunpack.c.l.b16 %v551
    %v584 = vunpack.c.l.b16 %v552
    %v585 = vunpack.c.l.b16 %v553
    %v586 = vunpack.c.l.b16 %v554
    %v587 = vunpack.c.l.b16 %v555
    %v588 = vunpack.c.l.b16 %v556
    %v589 = vunpack.c.l.b16 %v557
    %v590 = vunpack.c.l.b16 %v558
    %v591 = vunpack.c.l.b16 %v559
    %v592 = vunpack.c.l.b16 %v560
    %v593 = vunpack.c.l.b16 %v561
    %v594 = vunpack.c.l.b16 %v562
    %v595 = vpack.c.b16 %v580, %v579
    %v596 = vpack.c.b16 %v582, %v581
    %v597 = vpack.c.b16 %v584, %v583
    %v598 = vpack.c.b16 %v586, %v585
    %v599 = vpack.c.b16 %v588, %v587
    %v600 = vpack.c.b16 %v590, %v589
    %v601 = vpack.c.b16 %v592, %v591
    %v602 = vpack.c.b16 %v594, %v593
    %611 = vmatpush.bf16.msra.mxu0 %v602
    %612 = vmatpush.bf16.msra.mxu0 %v601
    %613 = vmatpush.bf16.msra.mxu0 %v600
    %614 = vmatpush.bf16.msra.mxu0 %v599
    %615 = vmatpush.bf16.msra.mxu0 %v598
    %616 = vmatpush.bf16.msra.mxu0 %v597
    %617 = vmatpush.bf16.msra.mxu0 %v596
    %618 = vmatpush.bf16.msra.mxu0 %v595
    %619 = vmatmul.bf16.gmra.mxu0 %v527
    %v620 = vpop.f32.mrf.mxu0
    %v621 = vadd.f32 0.0, %v620
    %v622 = vpop.f32.mrf.mxu0
    %v623 = vadd.f32 0.0, %v622
    %624 = vmatmul.bf16.gmra.mxu0 %v528
    %v625 = vpop.f32.mrf.mxu0
    %v626 = vadd.f32 0.0, %v625
    %v627 = vpop.f32.mrf.mxu0
    %v628 = vadd.f32 0.0, %v627
    %629 = vmatmul.bf16.gmra.mxu0 %v529
    %v630 = vpop.f32.mrf.mxu0
    %v631 = vadd.f32 0.0, %v630
    %v632 = vpop.f32.mrf.mxu0
    %v633 = vadd.f32 0.0, %v632
    %634 = vmatmul.bf16.gmra.mxu0 %v530
    %v635 = vpop.f32.mrf.mxu0
    %v636 = vadd.f32 0.0, %v635
    %v637 = vpop.f32.mrf.mxu0
    %v638 = vadd.f32 0.0, %v637
    %639 = vdwg.mxu0
    %v656 = vunpack.c.l.b16 %v531
    %v657 = vunpack.c.l.b16 %v532
    %v658 = vunpack.c.l.b16 %v533
    %v659 = vunpack.c.l.b16 %v534
    %v660 = vunpack.c.l.b16 %v535
    %v661 = vunpack.c.l.b16 %v536
    %v662 = vunpack.c.l.b16 %v537
    %v663 = vunpack.c.l.b16 %v538
    %v664 = vunpack.c.l.b16 %v539
    %v665 = vunpack.c.l.b16 %v540
    %v666 = vunpack.c.l.b16 %v541
    %v667 = vunpack.c.l.b16 %v542
    %v668 = vunpack.c.l.b16 %v543
    %v669 = vunpack.c.l.b16 %v544
    %v670 = vunpack.c.l.b16 %v545
    %v671 = vunpack.c.l.b16 %v546
    %v672 = vpack.c.b16 %v657, %v656
    %v673 = vpack.c.b16 %v659, %v658
    %v674 = vpack.c.b16 %v661, %v660
    %v675 = vpack.c.b16 %v663, %v662
    %v676 = vpack.c.b16 %v665, %v664
    %v677 = vpack.c.b16 %v667, %v666
    %v678 = vpack.c.b16 %v669, %v668
    %v679 = vpack.c.b16 %v671, %v670
    %688 = vmatpush.bf16.msra.mxu0 %v679
    %689 = vmatpush.bf16.msra.mxu0 %v678
    %690 = vmatpush.bf16.msra.mxu0 %v677
    %691 = vmatpush.bf16.msra.mxu0 %v676
    %692 = vmatpush.bf16.msra.mxu0 %v675
    %693 = vmatpush.bf16.msra.mxu0 %v674
    %694 = vmatpush.bf16.msra.mxu0 %v673
    %695 = vmatpush.bf16.msra.mxu0 %v672
    %696 = vmatmul.bf16.gmra.mxu0 %v494
    %v697 = vpop.f32.mrf.mxu0
    %v698 = vadd.f32 %v621, %v697
    %v699 = vpop.f32.mrf.mxu0
    %v700 = vadd.f32 %v623, %v699
    %701 = vmatmul.bf16.gmra.mxu0 %v495
    %v702 = vpop.f32.mrf.mxu0
    %v703 = vadd.f32 %v626, %v702
    %v704 = vpop.f32.mrf.mxu0
    %v705 = vadd.f32 %v628, %v704
    %706 = vmatmul.bf16.gmra.mxu0 %v496
    %v707 = vpop.f32.mrf.mxu0
    %v708 = vadd.f32 %v631, %v707
    %v709 = vpop.f32.mrf.mxu0
    %v710 = vadd.f32 %v633, %v709
    %711 = vmatmul.bf16.gmra.mxu0 %v497
    %v712 = vpop.f32.mrf.mxu0
    %v713 = vadd.f32 %v636, %v712
    %v714 = vpop.f32.mrf.mxu0
    %v715 = vadd.f32 %v638, %v714
    %716 = vdwg.mxu0
    %v717 = vld [vmem:[%s10] sm:$0x1]
    %v719 = vperm.slane %v717, 0
    %v721 = vmul.f32 %v698, %v719
    %v722 = vmul.f32 %v700, %v719
    %v723 = vmul.f32 %v703, %v719
    %v724 = vmul.f32 %v705, %v719
    %v725 = vmul.f32 %v708, %v719
    %v726 = vmul.f32 %v710, %v719
    %v727 = vmul.f32 %v713, %v719
    %v728 = vmul.f32 %v715, %v719
    %v729 = vld [vmem:[%s11] sm:$0x1]
    %v731 = vperm.slane %v729, 0
    %v733 = vadd.f32 %v721, %v731
    %v734 = vadd.f32 %v722, %v731
    %v735 = vadd.f32 %v723, %v731
    %v736 = vadd.f32 %v724, %v731
    %v737 = vadd.f32 %v725, %v731
    %v738 = vadd.f32 %v726, %v731
    %v739 = vadd.f32 %v727, %v731
    %v740 = vadd.f32 %v728, %v731
    %v741 = vmax.f32 %v733, 0.0
    %v742 = vmax.f32 %v734, 0.0
    %v743 = vmax.f32 %v735, 0.0
    %v744 = vmax.f32 %v736, 0.0
    %v745 = vmax.f32 %v737, 0.0
    %v746 = vmax.f32 %v738, 0.0
    %v747 = vmax.f32 %v739, 0.0
    %v748 = vmax.f32 %v740, 0.0
    %v749 = vpack.c.bf16 %v742, %v741
    %v750 = vpack.c.bf16 %v744, %v743
    %v751 = vpack.c.bf16 %v746, %v745
    %v752 = vpack.c.bf16 %v748, %v747
    %753 = vmatpush.bf16.msra.mxu0 0
    %754 = vmatpush.bf16.msra.mxu0 0
    %755 = vmatpush.bf16.msra.mxu0 0
    %756 = vmatpush.bf16.msra.mxu0 0
    %757 = vmatpush.bf16.msra.mxu0 %v752
    %758 = vmatpush.bf16.msra.mxu0 %v751
    %759 = vmatpush.bf16.msra.mxu0 %v750
    %760 = vmatpush.bf16.msra.mxu0 %v749
    %761 = vmatmul.bf16.gmra.mxu0 %v232
    %v762 = vpop.f32.mrf.mxu0
    %v763 = vadd.f32 0.0, %v762
    %v764 = vpop.f32.mrf.mxu0
    %v765 = vadd.f32 0.0, %v764
    %766 = vmatmul.bf16.gmra.mxu0 %v235
    %v767 = vpop.f32.mrf.mxu0
    %v768 = vadd.f32 0.0, %v767
    %v769 = vpop.f32.mrf.mxu0
    %v770 = vadd.f32 0.0, %v769
    %771 = vmatmul.bf16.gmra.mxu0 %v238
    %v772 = vpop.f32.mrf.mxu0
    %v773 = vadd.f32 0.0, %v772
    %v774 = vpop.f32.mrf.mxu0
    %v775 = vadd.f32 0.0, %v774
    %776 = vmatmul.bf16.gmra.mxu0 %v241
    %v777 = vpop.f32.mrf.mxu0
    %v778 = vadd.f32 0.0, %v777
    %v779 = vpop.f32.mrf.mxu0
    %v780 = vadd.f32 0.0, %v779
    %781 = vdwg.mxu0
    %v782 = vpack.c.bf16 %v765, %v763
    %v783 = vpack.c.bf16 %v770, %v768
    %v784 = vpack.c.bf16 %v775, %v773
    %v785 = vpack.c.bf16 %v780, %v778
    %v786 = vld [vmem:[#allocation12] sm:$0xf]
    %v787 = vld [vmem:[#allocation12 + $0x4] sm:$0xf]
    %v788 = vld [vmem:[#allocation12 + $0x8] sm:$0xf]
    %v789 = vld [vmem:[#allocation12 + $0xc] sm:$0xf]
    %v790 = vld [vmem:[#allocation12 + $0x10] sm:$0xf]
    %v791 = vld [vmem:[#allocation12 + $0x14] sm:$0xf]
    %v792 = vld [vmem:[#allocation12 + $0x18] sm:$0xf]
    %v793 = vld [vmem:[#allocation12 + $0x1c] sm:$0xf]
    %v794 = vld [vmem:[#allocation12 + $0x20] sm:$0xf]
    %v795 = vld [vmem:[#allocation12 + $0x24] sm:$0xf]
    %v796 = vld [vmem:[#allocation12 + $0x28] sm:$0xf]
    %v797 = vld [vmem:[#allocation12 + $0x2c] sm:$0xf]
    %v798 = vld [vmem:[#allocation12 + $0x30] sm:$0xf]
    %v799 = vld [vmem:[#allocation12 + $0x34] sm:$0xf]
    %v800 = vld [vmem:[#allocation12 + $0x38] sm:$0xf]
    %v801 = vld [vmem:[#allocation12 + $0x3c] sm:$0xf]
    %v802 = vld [vmem:[#allocation13] sm:$0xf]
    %v803 = vld [vmem:[#allocation13 + $0x4] sm:$0xf]
    %v804 = vld [vmem:[#allocation13 + $0x8] sm:$0xf]
    %v805 = vld [vmem:[#allocation13 + $0xc] sm:$0xf]
    %v806 = vld [vmem:[#allocation13 + $0x10] sm:$0xf]
    %v807 = vld [vmem:[#allocation13 + $0x14] sm:$0xf]
    %v808 = vld [vmem:[#allocation13 + $0x18] sm:$0xf]
    %v809 = vld [vmem:[#allocation13 + $0x1c] sm:$0xf]
    %v810 = vld [vmem:[#allocation13 + $0x20] sm:$0xf]
    %v811 = vld [vmem:[#allocation13 + $0x24] sm:$0xf]
    %v812 = vld [vmem:[#allocation13 + $0x28] sm:$0xf]
    %v813 = vld [vmem:[#allocation13 + $0x2c] sm:$0xf]
    %v814 = vld [vmem:[#allocation13 + $0x30] sm:$0xf]
    %v815 = vld [vmem:[#allocation13 + $0x34] sm:$0xf]
    %v816 = vld [vmem:[#allocation13 + $0x38] sm:$0xf]
    %v817 = vld [vmem:[#allocation13 + $0x3c] sm:$0xf]
    %v834 = vunpack.c.l.b16 %v802
    %v835 = vunpack.c.l.b16 %v803
    %v836 = vunpack.c.l.b16 %v804
    %v837 = vunpack.c.l.b16 %v805
    %v838 = vunpack.c.l.b16 %v806
    %v839 = vunpack.c.l.b16 %v807
    %v840 = vunpack.c.l.b16 %v808
    %v841 = vunpack.c.l.b16 %v809
    %v842 = vunpack.c.l.b16 %v810
    %v843 = vunpack.c.l.b16 %v811
    %v844 = vunpack.c.l.b16 %v812
    %v845 = vunpack.c.l.b16 %v813
    %v846 = vunpack.c.l.b16 %v814
    %v847 = vunpack.c.l.b16 %v815
    %v848 = vunpack.c.l.b16 %v816
    %v849 = vunpack.c.l.b16 %v817
    %v850 = vpack.c.b16 %v835, %v834
    %v851 = vpack.c.b16 %v837, %v836
    %v852 = vpack.c.b16 %v839, %v838
    %v853 = vpack.c.b16 %v841, %v840
    %v854 = vpack.c.b16 %v843, %v842
    %v855 = vpack.c.b16 %v845, %v844
    %v856 = vpack.c.b16 %v847, %v846
    %v857 = vpack.c.b16 %v849, %v848
    %866 = vmatpush.bf16.msra.mxu0 %v857
    %867 = vmatpush.bf16.msra.mxu0 %v856
    %868 = vmatpush.bf16.msra.mxu0 %v855
    %869 = vmatpush.bf16.msra.mxu0 %v854
    %870 = vmatpush.bf16.msra.mxu0 %v853
    %871 = vmatpush.bf16.msra.mxu0 %v852
    %872 = vmatpush.bf16.msra.mxu0 %v851
    %873 = vmatpush.bf16.msra.mxu0 %v850
    %874 = vmatmul.bf16.gmra.mxu0 %v782
    %v875 = vpop.f32.mrf.mxu0
    %v876 = vadd.f32 0.0, %v875
    %v877 = vpop.f32.mrf.mxu0
    %v878 = vadd.f32 0.0, %v877
    %879 = vmatmul.bf16.gmra.mxu0 %v783
    %v880 = vpop.f32.mrf.mxu0
    %v881 = vadd.f32 0.0, %v880
    %v882 = vpop.f32.mrf.mxu0
    %v883 = vadd.f32 0.0, %v882
    %884 = vmatmul.bf16.gmra.mxu0 %v784
    %v885 = vpop.f32.mrf.mxu0
    %v886 = vadd.f32 0.0, %v885
    %v887 = vpop.f32.mrf.mxu0
    %v888 = vadd.f32 0.0, %v887
    %889 = vmatmul.bf16.gmra.mxu0 %v785
    %v890 = vpop.f32.mrf.mxu0
    %v891 = vadd.f32 0.0, %v890
    %v892 = vpop.f32.mrf.mxu0
    %v893 = vadd.f32 0.0, %v892
    %894 = vdwg.mxu0
    %v911 = vunpack.c.l.b16 %v786
    %v912 = vunpack.c.l.b16 %v787
    %v913 = vunpack.c.l.b16 %v788
    %v914 = vunpack.c.l.b16 %v789
    %v915 = vunpack.c.l.b16 %v790
    %v916 = vunpack.c.l.b16 %v791
    %v917 = vunpack.c.l.b16 %v792
    %v918 = vunpack.c.l.b16 %v793
    %v919 = vunpack.c.l.b16 %v794
    %v920 = vunpack.c.l.b16 %v795
    %v921 = vunpack.c.l.b16 %v796
    %v922 = vunpack.c.l.b16 %v797
    %v923 = vunpack.c.l.b16 %v798
    %v924 = vunpack.c.l.b16 %v799
    %v925 = vunpack.c.l.b16 %v800
    %v926 = vunpack.c.l.b16 %v801
    %v927 = vpack.c.b16 %v912, %v911
    %v928 = vpack.c.b16 %v914, %v913
    %v929 = vpack.c.b16 %v916, %v915
    %v930 = vpack.c.b16 %v918, %v917
    %v931 = vpack.c.b16 %v920, %v919
    %v932 = vpack.c.b16 %v922, %v921
    %v933 = vpack.c.b16 %v924, %v923
    %v934 = vpack.c.b16 %v926, %v925
    %943 = vmatpush.bf16.msra.mxu0 %v934
    %944 = vmatpush.bf16.msra.mxu0 %v933
    %945 = vmatpush.bf16.msra.mxu0 %v932
    %946 = vmatpush.bf16.msra.mxu0 %v931
    %947 = vmatpush.bf16.msra.mxu0 %v930
    %948 = vmatpush.bf16.msra.mxu0 %v929
    %949 = vmatpush.bf16.msra.mxu0 %v928
    %950 = vmatpush.bf16.msra.mxu0 %v927
    %951 = vmatmul.bf16.gmra.mxu0 %v749
    %v952 = vpop.f32.mrf.mxu0
    %v953 = vadd.f32 %v876, %v952
    %v954 = vpop.f32.mrf.mxu0
    %v955 = vadd.f32 %v878, %v954
    %956 = vmatmul.bf16.gmra.mxu0 %v750
    %v957 = vpop.f32.mrf.mxu0
    %v958 = vadd.f32 %v881, %v957
    %v959 = vpop.f32.mrf.mxu0
    %v960 = vadd.f32 %v883, %v959
    %961 = vmatmul.bf16.gmra.mxu0 %v751
    %v962 = vpop.f32.mrf.mxu0
    %v963 = vadd.f32 %v886, %v962
    %v964 = vpop.f32.mrf.mxu0
    %v965 = vadd.f32 %v888, %v964
    %966 = vmatmul.bf16.gmra.mxu0 %v752
    %v967 = vpop.f32.mrf.mxu0
    %v968 = vadd.f32 %v891, %v967
    %v969 = vpop.f32.mrf.mxu0
    %v970 = vadd.f32 %v893, %v969
    %971 = vdwg.mxu0
    %v972 = vld [vmem:[%s12] sm:$0x1]
    %v974 = vperm.slane %v972, 0
    %v976 = vadd.f32 %v953, %v974
    %v977 = vadd.f32 %v955, %v974
    %v978 = vadd.f32 %v958, %v974
    %v979 = vadd.f32 %v960, %v974
    %v980 = vadd.f32 %v963, %v974
    %v981 = vadd.f32 %v965, %v974
    %v982 = vadd.f32 %v968, %v974
    %v983 = vadd.f32 %v970, %v974
    %v984 = vlaneseq
    %v985 = vand.u32 %v984, 127
    %vm986 = vcmp.lt.s32.totalorder %v985, 8
    %v987 = vsel %vm986, %v976, -1e+30
    %v988 = vsel %vm986, %v977, -1e+30
    %v989 = vsel %vm986, %v978, -1e+30
    %v990 = vsel %vm986, %v979, -1e+30
    %v991 = vsel %vm986, %v980, -1e+30
    %v992 = vsel %vm986, %v981, -1e+30
    %v993 = vsel %vm986, %v982, -1e+30
    %v994 = vsel %vm986, %v983, -1e+30
    %995 = vmax.xlane.f32.xlu0 %v987
    %v996 = vpop.xlane.xlu0 %995
    %997 = vmax.xlane.f32.xlu0 %v988
    %v998 = vpop.xlane.xlu0 %997
    %999 = vmax.xlane.f32.xlu0 %v989
    %v1000 = vpop.xlane.xlu0 %999
    %1001 = vmax.xlane.f32.xlu0 %v990
    %v1002 = vpop.xlane.xlu0 %1001
    %1003 = vmax.xlane.f32.xlu0 %v991
    %v1004 = vpop.xlane.xlu0 %1003
    %1005 = vmax.xlane.f32.xlu0 %v992
    %v1006 = vpop.xlane.xlu0 %1005
    %1007 = vmax.xlane.f32.xlu0 %v993
    %v1008 = vpop.xlane.xlu0 %1007
    %1009 = vmax.xlane.f32.xlu0 %v994
    %v1010 = vpop.xlane.xlu0 %1009
    %v1011 = vsub.f32 %v987, %v996
    %v1012 = vsub.f32 %v988, %v998
    %v1013 = vsub.f32 %v989, %v1000
    %v1014 = vsub.f32 %v990, %v1002
    %v1015 = vsub.f32 %v991, %v1004
    %v1016 = vsub.f32 %v992, %v1006
    %v1017 = vsub.f32 %v993, %v1008
    %v1018 = vsub.f32 %v994, %v1010
    %v1019 = vmul.f32 %v1011, 1.442695
    %v1020 = vpow.pop %v1019
    %v1021 = vmul.f32 %v1012, 1.442695
    %v1022 = vpow.pop %v1021
    %v1023 = vmul.f32 %v1013, 1.442695
    %v1024 = vpow.pop %v1023
    %v1025 = vmul.f32 %v1014, 1.442695
    %v1026 = vpow.pop %v1025
    %v1027 = vmul.f32 %v1015, 1.442695
    %v1028 = vpow.pop %v1027
    %v1029 = vmul.f32 %v1016, 1.442695
    %v1030 = vpow.pop %v1029
    %v1031 = vmul.f32 %v1017, 1.442695
    %v1032 = vpow.pop %v1031
    %v1033 = vmul.f32 %v1018, 1.442695
    %v1034 = vpow.pop %v1033
    %1035 = vadd.xlane.f32.xlu0 %v1020
    %v1036 = vpop.xlane.xlu0 %1035
    %1037 = vadd.xlane.f32.xlu0 %v1022
    %v1038 = vpop.xlane.xlu0 %1037
    %1039 = vadd.xlane.f32.xlu0 %v1024
    %v1040 = vpop.xlane.xlu0 %1039
    %1041 = vadd.xlane.f32.xlu0 %v1026
    %v1042 = vpop.xlane.xlu0 %1041
    %1043 = vadd.xlane.f32.xlu0 %v1028
    %v1044 = vpop.xlane.xlu0 %1043
    %1045 = vadd.xlane.f32.xlu0 %v1030
    %v1046 = vpop.xlane.xlu0 %1045
    %1047 = vadd.xlane.f32.xlu0 %v1032
    %v1048 = vpop.xlane.xlu0 %1047
    %1049 = vadd.xlane.f32.xlu0 %v1034
    %v1050 = vpop.xlane.xlu0 %1049
    %v1051 = vlog2.pop %v1036
    %v1052 = vmul.f32 %v1051, 0.6931472
    %v1053 = vlog2.pop %v1038
    %v1054 = vmul.f32 %v1053, 0.6931472
    %v1055 = vlog2.pop %v1040
    %v1056 = vmul.f32 %v1055, 0.6931472
    %v1057 = vlog2.pop %v1042
    %v1058 = vmul.f32 %v1057, 0.6931472
    %v1059 = vlog2.pop %v1044
    %v1060 = vmul.f32 %v1059, 0.6931472
    %v1061 = vlog2.pop %v1046
    %v1062 = vmul.f32 %v1061, 0.6931472
    %v1063 = vlog2.pop %v1048
    %v1064 = vmul.f32 %v1063, 0.6931472
    %v1065 = vlog2.pop %v1050
    %v1066 = vmul.f32 %v1065, 0.6931472
    %v1067 = vadd.f32 %v996, %v1052
    %v1068 = vadd.f32 %v998, %v1054
    %v1069 = vadd.f32 %v1000, %v1056
    %v1070 = vadd.f32 %v1002, %v1058
    %v1071 = vadd.f32 %v1004, %v1060
    %v1072 = vadd.f32 %v1006, %v1062
    %v1073 = vadd.f32 %v1008, %v1064
    %v1074 = vadd.f32 %v1010, %v1066
    %v1075 = vsub.f32 %v987, %v1067
    %v1076 = vsub.f32 %v988, %v1068
    %v1077 = vsub.f32 %v989, %v1069
    %v1078 = vsub.f32 %v990, %v1070
    %v1079 = vsub.f32 %v991, %v1071
    %v1080 = vsub.f32 %v992, %v1072
    %v1081 = vsub.f32 %v993, %v1073
    %v1082 = vsub.f32 %v994, %v1074
    %1083 = vst [vmem:[%s13] sm:$0xff] %v1075
    %1084 = vst [vmem:[%s13 + $0x8] sm:$0xff] %v1076
    %1085 = vst [vmem:[%s13 + $0x10] sm:$0xff] %v1077
    %1086 = vst [vmem:[%s13 + $0x18] sm:$0xff] %v1078
    %1087 = vst [vmem:[%s13 + $0x20] sm:$0xff] %v1079
    %1088 = vst [vmem:[%s13 + $0x28] sm:$0xff] %v1080
    %1089 = vst [vmem:[%s13 + $0x30] sm:$0xff] %v1081
    %1090 = vst [vmem:[%s13 + $0x38] sm:$0xff] %v1082
    // Predicated region
    $region86: #{graphsage_forward.1} parent=1 // pred_check
      _
    $region87: #{graphsage_forward.1} parent=1 // pred_check_branch
      %1092 = sbr.rel (0) target = $region89
    $region88: #{graphsage_forward.1} parent=1 // pred_region
      _
    $region89: #{graphsage_forward.1} parent=1 // pred_fallthru
      _
    // Predicated region
    $region90: #{graphsage_forward.1} parent=1 // pred_check
      _
    $region91: #{graphsage_forward.1} parent=1 // pred_check_branch
      %1094 = sbr.rel (0) target = $region93
    $region92: #{graphsage_forward.1} parent=1 // pred_region
      _
    $region93: #{graphsage_forward.1} parent=1 // pred_fallthru
      _
    %1095 = vsyncpa [#allocation3], 1
    %1096 = vsyncpa [#allocation5], 1
    %1097 = vsyncpa [#allocation8], 1
    %1098 = vsyncpa [#allocation11], 1
    %1099 = vsyncpa [#allocation14], 1

</llo_original>
